<compile_context>
chip_gen: v7x
topology: tpu7x:2x2x1
jax: 0.10.0
libtpu: 0.0.40
codegen_flags: <defaults>
</compile_context>

<pallas_src>
import math

import jax
import jax.numpy as jnp
from jax.experimental import pallas as pl
from jax.experimental.pallas import tpu as pltpu


def _flatten_copy_kernel(x_ref, o_ref):
    # Pure tile copy on a lane-dense slab.
    o_ref[...] = x_ref[...]


def _sublane_packing(itemsize: int) -> int:
    # f32 -> 8, bf16 -> 16, int8/fp8 -> 32 rows per vreg tile.
    return {4: 8, 2: 16, 1: 32}.get(itemsize, 8)


def _materialized_flatten(x: jax.Array, B: int, F: int) -> jax.Array:
    """Pallas copy producing a freshly materialized (B, F) array."""
    N = B * F
    itemsize = jnp.dtype(x.dtype).itemsize
    sub = _sublane_packing(itemsize)

    flat = x.reshape(N)

    # Pick a lane width L (multiple of 128) such that the slab (N//L, L) is
    # fully dense (rows a multiple of the sublane packing) without padding.
    L = None
    Np = N
    for cand in (1024, 512, 256, 128):
        if N % cand == 0 and (N // cand) % sub == 0:
            L = cand
            break
    if L is None:
        # Pad the flat array up to a dense slab; sliced back after the copy.
        L = 512
        unit = L * sub
        Np = pl.cdiv(N, unit) * unit
        flat = jnp.pad(flat, (0, Np - N))

    R = Np // L
    slab = flat.reshape(R, L)

    # Size blocks by bytes (~2 MiB target), rows kept a multiple of `sub` so
    # the (8,128) / packed-tile constraint is always satisfied.
    target_bytes = 2 << 20
    tr = (target_bytes // (L * itemsize)) // sub * sub
    tr = max(sub, min(tr, R))
    grid = (pl.cdiv(R, tr),)  # partial edge block handled by Pallas masking

    out_slab = pl.pallas_call(
        _flatten_copy_kernel,
        out_shape=jax.ShapeDtypeStruct((R, L), x.dtype),
        grid_spec=pltpu.PrefetchScalarGridSpec(
            num_scalar_prefetch=0,
            grid=grid,
            in_specs=[pl.BlockSpec((tr, L), lambda i: (i, 0))],
            out_specs=pl.BlockSpec((tr, L), lambda i: (i, 0)),
        ),
        compiler_params=pltpu.CompilerParams(
            # Single grid axis is independent per block -> shardable across
            # the two TensorCores on v7x.
            dimension_semantics=("parallel",),
        ),
        cost_estimate=pl.CostEstimate(
            flops=0, transcendentals=0, bytes_accessed=2 * Np * itemsize
        ),
    )(slab)

    out_flat = out_slab.reshape(Np)
    if Np != N:
        out_flat = out_flat[:N]
    return out_flat.reshape(B, F)


def flatten(x: jax.Array, *, materialize: bool = False) -> jax.Array:
    """Equivalent of torch Flatten: (B, ...) -> (B, prod(rest)).

    Default path is the metadata-only reshape (no HBM traffic), which is the
    correct translation of `x.view(x.size(0), -1)`. Set materialize=True to
    force a Pallas tiled copy (e.g. if a fresh contiguous buffer is needed).
    """
    B = x.shape[0]
    F = int(math.prod(x.shape[1:])) if x.ndim > 1 else 1
    if not materialize:
        return x.reshape(B, F)
    return _materialized_flatten(x, B, F)


if __name__ == "__main__":
    key = jax.random.PRNGKey(0)

    # Small NCHW input consistent with what this module sees (conv feature map).
    B, C, H, W = 2, 4, 16, 16
    x = jax.random.normal(key, (B, C, H, W), dtype=jnp.float32)

    # 1) Default (metadata-only) path — the recommended translation.
    y_view = flatten(x)
    y_view = jax.block_until_ready(y_view)

    # 2) Pallas copy path — exercises the kernel.
    y_copy = flatten(x, materialize=True)
    y_copy = jax.block_until_ready(y_copy)

    y_ref = x.reshape(B, -1)
    assert y_view.shape == (B, C * H * W) and y_view.dtype == x.dtype
    assert y_copy.shape == (B, C * H * W) and y_copy.dtype == x.dtype
    assert bool(jnp.array_equal(y_view, y_ref))
    assert bool(jnp.array_equal(y_copy, y_ref))

    # 3) Non-128-divisible shape exercises the padded-slab fallback.
    x2 = jax.random.normal(jax.random.PRNGKey(1), (2, 3, 5, 7), dtype=jnp.float32)
    y2 = jax.block_until_ready(flatten(x2, materialize=True))
    assert y2.shape == (2, 3 * 5 * 7)
    assert bool(jnp.array_equal(y2, x2.reshape(2, -1)))

    print("KERNEL_OK")
</pallas_src>

<mosaic_0001>
module attributes {stable_mosaic.version = 11 : i64} {
  func.func @_flatten_copy_kernel(%arg0: i32, %arg1: memref<8x256xf32, #tpu.memory_space<vmem>>, %arg2: memref<8x256xf32, #tpu.memory_space<vmem>>) attributes {dimension_semantics = [#tpu.dimension_semantics<parallel>], iteration_bounds = array<i64: 1>, scalar_prefetch = 0 : i64, scratch_operands = 0 : i64, tpu.core_type = #tpu.core_type<tc>, window_params = [{transform_indices = @transform_0, window_bounds = array<i64: 8, 256>}, {transform_indices = @transform_1, window_bounds = array<i64: 8, 256>}]} {
    %c0 = arith.constant 0 : index
    %c0_0 = arith.constant 0 : index
    %0 = vector.load %arg1[%c0, %c0_0] : memref<8x256xf32, #tpu.memory_space<vmem>>, vector<8x256xf32>
    %c0_1 = arith.constant 0 : index
    %c0_2 = arith.constant 0 : index
    %1 = vector.load %arg2[%c0_1, %c0_2] : memref<8x256xf32, #tpu.memory_space<vmem>>, vector<8x256xf32>
    tpu.vector_store %arg2[%c0_1, %c0_2], %0 {strides = array<i32>} : memref<8x256xf32, #tpu.memory_space<vmem>>, vector<8x256xf32>,
    return
  }
  func.func @transform_0(%arg0: i32) -> (i32, i32) {
    %c0_i32 = arith.constant 0 : i32
    %c0_i32_0 = arith.constant 0 : i32
    return %arg0, %c0_i32 : i32, i32
  }
  func.func @transform_1(%arg0: i32) -> (i32, i32) {
    %c0_i32 = arith.constant 0 : i32
    %c0_i32_0 = arith.constant 0 : i32
    return %arg0, %c0_i32 : i32, i32
  }
}

</mosaic_0001>

<llo_original>
// kernel: tpu_custom_call.1
$region0: #{tpu_custom_call.1}
  #allocation0 [shape = 'u32[]', space=smem, size = 0x4, offset = 0x4, fixed_abs, tag = 'smem constant byte address 0x4 - core index']
  #allocation1 [shape = 'u32[144,128]{1,0:T(1,128)}', space=vmem, size = 0x12000, scoped, tag = 'internal scratch']
  %s0 = inlined_call_operand.hbm [shape: f32[8,256], index: 0, kind: input, shape index: {}]
  %s1 = inlined_call_operand.hbm [shape: f32[8,256], index: 1, kind: output, shape index: {}]
  %s2 = sld [smem:[#allocation0]]
  $region18: #{tpu_custom_call.1} parent=0
    _
  %s4 = ssub.s32 1, %s2
  %s5 = scalar_select 0, %s4, %s2
  $region1: #{tpu_custom_call.1} parent=0
    #allocation2 [shape = 'u8[8192]{0}', space=vmem, size = 0x2000, scoped, tag = 'input window, operand 0, single buffered']
    #allocation3 [shape = 's32[1]{0}', space=sflag, size = 0x4, scoped, tag = 'scoped memory for tpu_custom_call.1']
    #allocation4 [shape = 's32[1]{0}', space=sflag, size = 0x4, scoped, tag = 'scoped memory for tpu_custom_call.1']
    #allocation5 [shape = 'u8[8192]{0}', space=vmem, size = 0x2000, scoped, tag = 'output window, operand 0, single buffered']
    %6 = vsyncpa [#allocation3], 0
    %7 = vsyncpa [#allocation4], 0
    // Predicated region
    $region2: #{tpu_custom_call.1} parent=1 // pred_check
      _
    $region3: #{tpu_custom_call.1} parent=1 // pred_check_branch
      %9 = sbr.rel (0) target = $region5
    $region4: #{tpu_custom_call.1} parent=1 // pred_region
      %s11 = ssub.s32 256, 256
      %12 = vsyncadd [#allocation3], %s11
      %s14 = sshll.u32 [#allocation2], 4
      %s15 = int_to_ptr.vmem [resolvable:$true] %s14
      %17 = dma.hbm_to_vmem [thread:$0]  %s0, 256, %s15, [#allocation3]
    $region5: #{tpu_custom_call.1} parent=1 // pred_fallthru
      _
    // Predicated region
    $region6: #{tpu_custom_call.1} parent=1 // pred_check
      _
    $region7: #{tpu_custom_call.1} parent=1 // pred_check_branch
      %19 = sbr.rel (0) target = $region9
    $region8: #{tpu_custom_call.1} parent=1 // pred_region
      %20 = dma.done [#allocation3], 256
    $region9: #{tpu_custom_call.1} parent=1 // pred_fallthru
      _
    %v21 = vld [vmem:[#allocation2] sm:$0xff]
    %v22 = vld [vmem:[#allocation2 + $0x8] sm:$0xff]
    %23 = vst [vmem:[#allocation5] sm:$0xff] %v21
    %24 = vst [vmem:[#allocation5 + $0x8] sm:$0xff] %v22
    // Predicated region
    $region10: #{tpu_custom_call.1} parent=1 // pred_check
      _
    $region11: #{tpu_custom_call.1} parent=1 // pred_check_branch
      %26 = sbr.rel (0) target = $region13
    $region12: #{tpu_custom_call.1} parent=1 // pred_region
      %s28 = ssub.s32 256, 256
      %29 = vsyncadd [#allocation4], %s28
      %s31 = sshll.u32 [#allocation5], 4
      %s32 = int_to_ptr.vmem [resolvable:$true] %s31
      %34 = dma.vmem_to_hbm [thread:$0]  %s32, 256, %s1, [#allocation4]
    $region13: #{tpu_custom_call.1} parent=1 // pred_fallthru
      _
    // Predicated region
    $region14: #{tpu_custom_call.1} parent=1 // pred_check
      _
    $region15: #{tpu_custom_call.1} parent=1 // pred_check_branch
      %36 = sbr.rel (0) target = $region17
    $region16: #{tpu_custom_call.1} parent=1 // pred_region
      %37 = dma.done [#allocation4], 256
    $region17: #{tpu_custom_call.1} parent=1 // pred_fallthru
      _
    %38 = vsyncpa [#allocation3], 1
    %39 = vsyncpa [#allocation4], 1

</llo_original>
